<compile_context>
chip_gen: v5e
topology: v5e:2x2
jax: 0.10.0
libtpu: 0.0.40
codegen_flags: <defaults>
</compile_context>

<pallas_src>
import math
import jax
import jax.numpy as jnp
from jax import lax
from jax.experimental import pallas as pl
from jax.experimental.pallas import tpu as pltpu


def _pos_enc_kernel(t_ref, freqs_ref, phase_ref, w1_ref, b1_ref, w2_ref, b2_ref, out_ref):
    # t_ref:     [bm, 1]           timestep tile (f32)
    # freqs_ref: [1, dim]          [freqs, freqs]
    # phase_ref: [1, dim]          [pi/2 * ones(half), zeros(half)]
    # w1_ref:    [4*dim, dim]      proj1 weight, PyTorch [out, in] layout
    # b1_ref:    [1, 4*dim]
    # w2_ref:    [4*dim, 4*dim]    proj2 weight, PyTorch [out, in] layout
    # b2_ref:    [1, 4*dim]
    # out_ref:   [bm, 4*dim]
    t = t_ref[...]                                            # [bm, 1]
    # Fused sinusoidal embedding: first half is cos (phase pi/2), second half sin.
    emb = jnp.sin(t * freqs_ref[...] + phase_ref[...])        # [bm, dim]

    # Contract emb axis 1 with weight axis 1 ("in") -> no wrapper-side transpose needed.
    dn = (((1,), (1,)), ((), ()))
    h = lax.dot_general(emb, w1_ref[...], dimension_numbers=dn,
                        preferred_element_type=jnp.float32) + b1_ref[...]
    h = jnp.maximum(h, 0.0)                                   # ReLU
    out = lax.dot_general(h, w2_ref[...], dimension_numbers=dn,
                          preferred_element_type=jnp.float32) + b2_ref[...]
    out_ref[...] = out.astype(out_ref.dtype)


def positional_encoding(timesteps, params, dim, max_period=10000, block_b=128):
    """timesteps: [B] (any float/int dtype). Returns [B, 4*dim] f32."""
    assert dim % 2 == 0, "odd `dim` zero-pad branch not implemented"
    # TODO(synk): if dim were odd, append a zero column to the embedding (cheap glue).
    B = timesteps.shape[0]
    half = dim // 2
    hidden = 4 * dim

    # Batch tile: multiple of 8 (sublane), capped at block_b; pad B up to a multiple of it.
    bm = min(block_b, -(-B // 8) * 8)
    Bp = -(-B // bm) * bm

    t = timesteps.astype(jnp.float32).reshape(B, 1)
    if Bp != B:
        t = jnp.pad(t, ((0, Bp - B), (0, 0)))

    k = jnp.arange(half, dtype=jnp.float32)
    freqs_half = jnp.exp(-math.log(max_period) * k / half)
    freqs_full = jnp.concatenate([freqs_half, freqs_half]).reshape(1, dim)
    phase = jnp.concatenate(
        [jnp.full((half,), jnp.pi / 2, jnp.float32),
         jnp.zeros((half,), jnp.float32)]
    ).reshape(1, dim)

    w1 = params["w1"]                       # [4*dim, dim]   (no transpose)
    b1 = params["b1"].reshape(1, hidden)
    w2 = params["w2"]                       # [4*dim, 4*dim] (no transpose)
    b2 = params["b2"].reshape(1, hidden)

    grid = (Bp // bm,)
    resident = lambda shape: pl.BlockSpec(shape, lambda i: (0, 0))  # stays in VMEM

    # Scoped-VMEM sizing: resident weights/consts + double-buffered t/out tiles + slack.
    weight_bytes = 4 * (hidden * dim + hidden * hidden + 2 * hidden + 2 * dim)
    io_bytes = 4 * 2 * (bm * 1 + bm * hidden)
    vmem_limit = int(min(128 * 1024 * 1024,
                         max(32 * 1024 * 1024, 2 * weight_bytes + 4 * io_bytes)))

    cost = pl.CostEstimate(
        flops=2 * Bp * dim * hidden + 2 * Bp * hidden * hidden,
        transcendentals=Bp * dim,
        bytes_accessed=4 * (Bp * 1 + 2 * dim + hidden * dim + hidden
                            + hidden * hidden + hidden + Bp * hidden),
    )

    out = pl.pallas_call(
        _pos_enc_kernel,
        out_shape=jax.ShapeDtypeStruct((Bp, hidden), jnp.float32),
        grid=grid,
        in_specs=[
            pl.BlockSpec((bm, 1), lambda i: (i, 0)),   # t: tiled over batch
            resident((1, dim)),                        # freqs_full
            resident((1, dim)),                        # phase
            resident((hidden, dim)),                   # w1
            resident((1, hidden)),                     # b1
            resident((hidden, hidden)),                # w2
            resident((1, hidden)),                     # b2
        ],
        out_specs=pl.BlockSpec((bm, hidden), lambda i: (i, 0)),
        compiler_params=pltpu.CompilerParams(
            dimension_semantics=("parallel",),
            vmem_limit_bytes=vmem_limit,
        ),
        cost_estimate=cost,
    )(t, freqs_full, phase, w1, b1, w2, b2)

    return out[:B] if Bp != B else out


def _init_params(key, dim):
    """Deterministic init matching nn.Linear default (uniform +-1/sqrt(fan_in)).
    Weights kept in PyTorch [out, in] layout — the kernel contracts on axis 1 directly."""
    k1, k2, k3, k4 = jax.random.split(key, 4)
    bound1 = 1.0 / math.sqrt(dim)
    bound2 = 1.0 / math.sqrt(4 * dim)
    return {
        "w1": jax.random.uniform(k1, (4 * dim, dim), jnp.float32, -bound1, bound1),
        "b1": jax.random.uniform(k2, (4 * dim,), jnp.float32, -bound1, bound1),
        "w2": jax.random.uniform(k3, (4 * dim, 4 * dim), jnp.float32, -bound2, bound2),
        "b2": jax.random.uniform(k4, (4 * dim,), jnp.float32, -bound2, bound2),
    }


def _reference(timesteps, params, dim, max_period=10000):
    half = dim // 2
    freqs = jnp.exp(-math.log(max_period) * jnp.arange(half, dtype=jnp.float32) / half)
    args = timesteps.astype(jnp.float32)[:, None] * freqs[None]
    emb = jnp.concatenate([jnp.cos(args), jnp.sin(args)], axis=-1)
    h = emb @ params["w1"].T + params["b1"]
    h = jnp.maximum(h, 0.0)
    return h @ params["w2"].T + params["b2"]


if __name__ == "__main__":
    key = jax.random.PRNGKey(0)
    dim = 32          # embedding dim -> hidden = 128
    B = 8             # batch of timesteps

    kp, kt = jax.random.split(key)
    params = _init_params(kp, dim)
    timesteps = jax.random.uniform(kt, (B,), jnp.float32, 0.0, 1000.0)

    out = positional_encoding(timesteps, params, dim)
    out = jax.block_until_ready(out)

    ref = _reference(timesteps, params, dim)
    assert out.shape == (B, 4 * dim)
    # sin(x + pi/2) vs cos(x) differ by at most a few f32 ulps of the (large) argument,
    # so allow a slightly looser tolerance than exact-bit matching.
    assert jnp.allclose(out, ref, atol=1e-3, rtol=1e-3), "mismatch vs reference"
    print("KERNEL_OK")
</pallas_src>

<mosaic_0001>
module attributes {stable_mosaic.version = 11 : i64} {
  func.func @_pos_enc_kernel(%arg0: i32, %arg1: memref<8x1xf32, #tpu.memory_space<vmem>>, %arg2: memref<1x32xf32, #tpu.memory_space<vmem>>, %arg3: memref<1x32xf32, #tpu.memory_space<vmem>>, %arg4: memref<128x32xf32, #tpu.memory_space<vmem>>, %arg5: memref<1x128xf32, #tpu.memory_space<vmem>>, %arg6: memref<128x128xf32, #tpu.memory_space<vmem>>, %arg7: memref<1x128xf32, #tpu.memory_space<vmem>>, %arg8: memref<8x128xf32, #tpu.memory_space<vmem>>) attributes {dimension_semantics = [#tpu.dimension_semantics<parallel>], iteration_bounds = array<i64: 1>, scalar_prefetch = 0 : i64, scratch_operands = 0 : i64, tpu.core_type = #tpu.core_type<tc>, window_params = [{transform_indices = @transform_0, window_bounds = array<i64: 8, 1>}, {pipeline_mode = #tpu.pipeline_mode<synchronous>, transform_indices = @transform_1, window_bounds = array<i64: 1, 32>}, {pipeline_mode = #tpu.pipeline_mode<synchronous>, transform_indices = @transform_2, window_bounds = array<i64: 1, 32>}, {pipeline_mode = #tpu.pipeline_mode<synchronous>, transform_indices = @transform_3, window_bounds = array<i64: 128, 32>}, {pipeline_mode = #tpu.pipeline_mode<synchronous>, transform_indices = @transform_4, window_bounds = array<i64: 1, 128>}, {pipeline_mode = #tpu.pipeline_mode<synchronous>, transform_indices = @transform_5, window_bounds = array<i64: 128, 128>}, {pipeline_mode = #tpu.pipeline_mode<synchronous>, transform_indices = @transform_6, window_bounds = array<i64: 1, 128>}, {transform_indices = @transform_7, window_bounds = array<i64: 8, 128>}]} {
    %c0 = arith.constant 0 : index
    %c0_0 = arith.constant 0 : index
    %0 = vector.load %arg1[%c0, %c0_0] : memref<8x1xf32, #tpu.memory_space<vmem>>, vector<8x1xf32>
    %c0_1 = arith.constant 0 : index
    %c0_2 = arith.constant 0 : index
    %1 = vector.load %arg2[%c0_1, %c0_2] : memref<1x32xf32, #tpu.memory_space<vmem>>, vector<1x32xf32>
    %2 = vector.broadcast %0 : vector<8x1xf32> to vector<8x32xf32>
    %3 = vector.broadcast %1 : vector<1x32xf32> to vector<8x32xf32>
    %4 = arith.mulf %2, %3 : vector<8x32xf32>
    %c0_3 = arith.constant 0 : index
    %c0_4 = arith.constant 0 : index
    %5 = vector.load %arg3[%c0_3, %c0_4] : memref<1x32xf32, #tpu.memory_space<vmem>>, vector<1x32xf32>
    %6 = vector.broadcast %5 : vector<1x32xf32> to vector<8x32xf32>
    %7 = arith.addf %4, %6 : vector<8x32xf32>
    %8 = math.sin %7 : vector<8x32xf32>
    %c0_5 = arith.constant 0 : index
    %c0_6 = arith.constant 0 : index
    %9 = vector.load %arg4[%c0_5, %c0_6] : memref<128x32xf32, #tpu.memory_space<vmem>>, vector<128x32xf32>
    %cst = arith.constant dense<0.000000e+00> : vector<8x128xf32>
    %10 = tpu.matmul %8, %9, %cst {dimension_numbers = #tpu.dot_dimension_numbers<[1], [1], [0], [0], [0, 0, 1, 0], [], []>} : vector<8x32xf32>, vector<128x32xf32>, vector<8x128xf32> -> vector<8x128xf32>
    %c0_7 = arith.constant 0 : index
    %c0_8 = arith.constant 0 : index
    %11 = vector.load %arg5[%c0_7, %c0_8] : memref<1x128xf32, #tpu.memory_space<vmem>>, vector<1x128xf32>
    %12 = vector.broadcast %11 : vector<1x128xf32> to vector<8x128xf32>
    %13 = arith.addf %10, %12 : vector<8x128xf32>
    %cst_9 = arith.constant 0.000000e+00 : f32
    %14 = vector.broadcast %cst_9 : f32 to vector<8x128xf32>
    %15 = arith.maximumf %13, %14 : vector<8x128xf32>
    %c0_10 = arith.constant 0 : index
    %c0_11 = arith.constant 0 : index
    %16 = vector.load %arg6[%c0_10, %c0_11] : memref<128x128xf32, #tpu.memory_space<vmem>>, vector<128x128xf32>
    %cst_12 = arith.constant dense<0.000000e+00> : vector<8x128xf32>
    %17 = tpu.matmul %15, %16, %cst_12 {dimension_numbers = #tpu.dot_dimension_numbers<[1], [1], [0], [0], [0, 0, 1, 0], [], []>} : vector<8x128xf32>, vector<128x128xf32>, vector<8x128xf32> -> vector<8x128xf32>
    %c0_13 = arith.constant 0 : index
    %c0_14 = arith.constant 0 : index
    %18 = vector.load %arg7[%c0_13, %c0_14] : memref<1x128xf32, #tpu.memory_space<vmem>>, vector<1x128xf32>
    %19 = vector.broadcast %18 : vector<1x128xf32> to vector<8x128xf32>
    %20 = arith.addf %17, %19 : vector<8x128xf32>
    %c0_15 = arith.constant 0 : index
    %c0_16 = arith.constant 0 : index
    %21 = vector.load %arg8[%c0_15, %c0_16] : memref<8x128xf32, #tpu.memory_space<vmem>>, vector<8x128xf32>
    tpu.vector_store %arg8[%c0_15, %c0_16], %20 {strides = array<i32>} : memref<8x128xf32, #tpu.memory_space<vmem>>, vector<8x128xf32>,
    return
  }
  func.func @transform_0(%arg0: i32) -> (i32, i32) {
    %c0_i32 = arith.constant 0 : i32
    %c0_i32_0 = arith.constant 0 : i32
    return %arg0, %c0_i32 : i32, i32
  }
  func.func @transform_1(%arg0: i32) -> (i32, i32) {
    %c0_i32 = arith.constant 0 : i32
    %c0_i32_0 = arith.constant 0 : i32
    %c0_i32_1 = arith.constant 0 : i32
    return %c0_i32, %c0_i32_0 : i32, i32
  }
  func.func @transform_2(%arg0: i32) -> (i32, i32) {
    %c0_i32 = arith.constant 0 : i32
    %c0_i32_0 = arith.constant 0 : i32
    %c0_i32_1 = arith.constant 0 : i32
    return %c0_i32, %c0_i32_0 : i32, i32
  }
  func.func @transform_3(%arg0: i32) -> (i32, i32) {
    %c0_i32 = arith.constant 0 : i32
    %c0_i32_0 = arith.constant 0 : i32
    %c0_i32_1 = arith.constant 0 : i32
    return %c0_i32, %c0_i32_0 : i32, i32
  }
  func.func @transform_4(%arg0: i32) -> (i32, i32) {
    %c0_i32 = arith.constant 0 : i32
    %c0_i32_0 = arith.constant 0 : i32
    %c0_i32_1 = arith.constant 0 : i32
    return %c0_i32, %c0_i32_0 : i32, i32
  }
  func.func @transform_5(%arg0: i32) -> (i32, i32) {
    %c0_i32 = arith.constant 0 : i32
    %c0_i32_0 = arith.constant 0 : i32
    %c0_i32_1 = arith.constant 0 : i32
    return %c0_i32, %c0_i32_0 : i32, i32
  }
  func.func @transform_6(%arg0: i32) -> (i32, i32) {
    %c0_i32 = arith.constant 0 : i32
    %c0_i32_0 = arith.constant 0 : i32
    %c0_i32_1 = arith.constant 0 : i32
    return %c0_i32, %c0_i32_0 : i32, i32
  }
  func.func @transform_7(%arg0: i32) -> (i32, i32) {
    %c0_i32 = arith.constant 0 : i32
    %c0_i32_0 = arith.constant 0 : i32
    return %arg0, %c0_i32 : i32, i32
  }
}

</mosaic_0001>

<llo_original>
// kernel: tpu_custom_call.1
$region0: #{tpu_custom_call.1}
  #allocation0 [shape = 'u32[]', space=smem, size = 0x4, offset = 0x4, fixed_abs, tag = 'smem constant byte address 0x4 - core index']
  #allocation1 [shape = 'u32[72,128]{1,0:T(1,128)}', space=vmem, size = 0x9000, scoped, tag = 'internal scratch']
  %s0 = inlined_call_operand.vmem [shape: f32[8,1], index: 0, kind: input, shape index: {}]
  %s1 = inlined_call_operand.vmem [shape: f32[1,32], index: 1, kind: input, shape index: {}]
  %s2 = inlined_call_operand.vmem [shape: f32[1,32], index: 2, kind: input, shape index: {}]
  %s3 = inlined_call_operand.vmem [shape: f32[128,32], index: 3, kind: input, shape index: {}]
  %s4 = inlined_call_operand.vmem [shape: f32[1,128], index: 4, kind: input, shape index: {}]
  %s5 = inlined_call_operand.vmem [shape: f32[128,128], index: 5, kind: input, shape index: {}]
  %s6 = inlined_call_operand.vmem [shape: f32[1,128], index: 6, kind: input, shape index: {}]
  %s7 = inlined_call_operand.hbm [shape: f32[8,128], index: 7, kind: output, shape index: {}]
  %s8 = sld [smem:[#allocation0]]
  $region38: #{tpu_custom_call.1} parent=0
    _
  %s10 = ssub.s32 1, %s8
  %s11 = scalar_select 0, %s10, %s8
  $region1: #{tpu_custom_call.1} parent=0
    #allocation2 [shape = 'u8[4096]{0}', space=vmem, size = 0x1000, scoped, tag = 'output window, operand 0, single buffered']
    #allocation3 [shape = 's32[1]{0}', space=sflag, size = 0x4, scoped, tag = 'scoped memory for tpu_custom_call.1']
    %12 = vsyncpa [#allocation3], 0
    // Predicated region
    $region2: #{tpu_custom_call.1} parent=1 // pred_check
      _
    $region3: #{tpu_custom_call.1} parent=1 // pred_check_branch
      %14 = sbr.rel (0) target = $region5
    $region4: #{tpu_custom_call.1} parent=1 // pred_region
      _
    $region5: #{tpu_custom_call.1} parent=1 // pred_fallthru
      _
    // Predicated region
    $region6: #{tpu_custom_call.1} parent=1 // pred_check
      _
    $region7: #{tpu_custom_call.1} parent=1 // pred_check_branch
      %16 = sbr.rel (0) target = $region9
    $region8: #{tpu_custom_call.1} parent=1 // pred_region
      _
    $region9: #{tpu_custom_call.1} parent=1 // pred_fallthru
      _
    // Predicated region
    $region10: #{tpu_custom_call.1} parent=1 // pred_check
      _
    $region11: #{tpu_custom_call.1} parent=1 // pred_check_branch
      %18 = sbr.rel (0) target = $region13
    $region12: #{tpu_custom_call.1} parent=1 // pred_region
      _
    $region13: #{tpu_custom_call.1} parent=1 // pred_fallthru
      _
    // Predicated region
    $region14: #{tpu_custom_call.1} parent=1 // pred_check
      _
    $region15: #{tpu_custom_call.1} parent=1 // pred_check_branch
      %20 = sbr.rel (0) target = $region17
    $region16: #{tpu_custom_call.1} parent=1 // pred_region
      _
    $region17: #{tpu_custom_call.1} parent=1 // pred_fallthru
      _
    // Predicated region
    $region18: #{tpu_custom_call.1} parent=1 // pred_check
      _
    $region19: #{tpu_custom_call.1} parent=1 // pred_check_branch
      %22 = sbr.rel (0) target = $region21
    $region20: #{tpu_custom_call.1} parent=1 // pred_region
      _
    $region21: #{tpu_custom_call.1} parent=1 // pred_fallthru
      _
    // Predicated region
    $region22: #{tpu_custom_call.1} parent=1 // pred_check
      _
    $region23: #{tpu_custom_call.1} parent=1 // pred_check_branch
      %24 = sbr.rel (0) target = $region25
    $region24: #{tpu_custom_call.1} parent=1 // pred_region
      _
    $region25: #{tpu_custom_call.1} parent=1 // pred_fallthru
      _
    // Predicated region
    $region26: #{tpu_custom_call.1} parent=1 // pred_check
      _
    $region27: #{tpu_custom_call.1} parent=1 // pred_check_branch
      %26 = sbr.rel (0) target = $region29
    $region28: #{tpu_custom_call.1} parent=1 // pred_region
      _
    $region29: #{tpu_custom_call.1} parent=1 // pred_fallthru
      _
    %v27 = vld [vmem:[%s0] sm:$0xff]
    %v28 = vld [vmem:[%s1] sm:$0x1]
    %30 = vset.pattern.permute.xlu0 0
    %31 = vperm.xlu0 %30, %v27
    %v32 = vpop.permute.xlu0 %31
    %v35 = vperm.slane %v28, 0
    %v37 = vmul.f32 %v32, %v35
    %v38 = vld [vmem:[%s2] sm:$0x1]
    %v40 = vperm.slane %v38, 0
    %v42 = vadd.f32 %v37, %v40
    %v43 = vand.u32 2147483647, %v42
    %vm44 = vcmp.le.f32.partialorder %v43, 0.7853982
    %vm45 = vcmp.lt.s32.totalorder %v42, 0
    %v46 = vand.u32 %v42, 2139095040
    %v47 = vshrl.u32 %v46, 23
    %v48 = vsub.s32 %v47, 127
    %v49 = vand.u32 2147483647, %v42
    %v50 = vand.u32 %v49, 8388607
    %v51 = vor.u32 %v50, 8388608
    %v52 = vsub.s32 0, %v51
    %v53 = vadd.s32 %v48, 1
    %vm54 = vcmp.gt.s32.totalorder %v53, 0
    %v55 = vsel %vm54, %v53, 0
    %v56 = vshrl.u32 %v55, 5
    %v57 = vand.u32 %v55, 31
    %v58 = vsub.s32 32, %v57
    %v59 = vshrl.u32 683565275, %v58
    %v60 = vshll.u32 683565275, %v57
    %v61 = vshrl.u32 2475754826, %v58
    %v62 = vor.u32 %v60, %v61
    %v63 = vshll.u32 2475754826, %v57
    %v64 = vshrl.u32 2131351028, %v58
    %v65 = vor.u32 %v63, %v64
    %v66 = vshll.u32 2131351028, %v57
    %v67 = vshrl.u32 2102212464, %v58
    %v68 = vor.u32 %v66, %v67
    %v69 = vshll.u32 2102212464, %v57
    %v70 = vshrl.u32 920167782, %v58
    %v71 = vor.u32 %v69, %v70
    %v72 = vshll.u32 920167782, %v57
    %v73 = vshrl.u32 1326507024, %v58
    %v74 = vor.u32 %v72, %v73
    %vm75 = vcmp.lt.s32.totalorder %v56, 1
    %vm76 = vcmp.lt.s32.totalorder %v56, 2
    %vm77 = vcmp.lt.s32.totalorder %v56, 3
    %vm78 = vcmp.lt.s32.totalorder %v56, 4
    %v79 = vsel %vm75, %v59, %v62
    %v80 = vsel %vm78, %v68, 2102212464
    %v81 = vsel %vm77, %v65, %v80
    %v82 = vsel %vm76, %v79, %v81
    %v83 = vsel %vm75, %v62, %v65
    %v84 = vsel %vm78, %v71, 920167782
    %v85 = vsel %vm77, %v68, %v84
    %v86 = vsel %vm76, %v83, %v85
    %v87 = vsel %vm75, %v65, %v68
    %v88 = vsel %vm78, %v74, 1326507024
    %v89 = vsel %vm77, %v71, %v88
    %v90 = vsel %vm76, %v87, %v89
    %v91 = vshll.u32 %v51, 8
    %v92 = vand.u32 %v91, 65535
    %v93 = vshrl.u32 %v91, 16
    %v94 = vand.u32 %v90, 65535
    %v95 = vshrl.u32 %v90, 16
    %v96 = vmul.u32 %v92, %v94
    %v97 = vmul.u32 %v92, %v95
    %v98 = vmul.u32 %v93, %v94
    %v99 = vmul.u32 %v93, %v95
    %v100 = vshll.u32 %v97, 16
    %v101 = vshrl.u32 %v97, 16
    %v102 = vshll.u32 %v98, 16
    %v103 = vshrl.u32 %v98, 16
    %vm104 = vc.u32 %v96, %v100
    %v105 = vsel %vm104, 1, 0
    %v106 = vadd.s32 %v96, %v100
    %v107 = vadd.s32 %v99, %v105
    %vm108 = vc.u32 %v106, %v102
    %v109 = vsel %vm108, 1, 0
    %v110 = vadd.s32 %v106, %v102
    %v111 = vadd.s32 %v107, %v109
    %v112 = vadd.s32 %v111, %v101
    %v113 = vadd.s32 %v112, %v103
    %v114 = vand.u32 %v91, 65535
    %v115 = vshrl.u32 %v91, 16
    %v116 = vand.u32 %v86, 65535
    %v117 = vshrl.u32 %v86, 16
    %v118 = vmul.u32 %v114, %v116
    %v119 = vmul.u32 %v114, %v117
    %v120 = vmul.u32 %v115, %v116
    %v121 = vmul.u32 %v115, %v117
    %v122 = vshll.u32 %v119, 16
    %v123 = vshrl.u32 %v119, 16
    %v124 = vshll.u32 %v120, 16
    %v125 = vshrl.u32 %v120, 16
    %vm126 = vc.u32 %v118, %v122
    %v127 = vsel %vm126, 1, 0
    %v128 = vadd.s32 %v118, %v122
    %v129 = vadd.s32 %v121, %v127
    %vm130 = vc.u32 %v128, %v124
    %v131 = vsel %vm130, 1, 0
    %v132 = vadd.s32 %v128, %v124
    %v133 = vadd.s32 %v129, %v131
    %v134 = vadd.s32 %v133, %v123
    %v135 = vadd.s32 %v134, %v125
    %v136 = vmul.u32 %v91, %v82
    %v137 = vadd.s32 %v113, %v132
    %vm138 = vc.u32 %v113, %v132
    %v139 = vadd.s32 %v135, 1
    %v140 = vsel %vm138, %v139, %v135
    %v141 = vadd.s32 %v136, %v140
    %v142 = vadd.s32 %v141, 536870912
    %v143 = vshrl.u32 %v142, 30
    %v144 = vshll.u32 %v143, 30
    %v145 = vsub.s32 %v141, %v144
    %vm146 = vcmp.lt.s32.totalorder %v145, 0
    %v147 = vsub.s32 0, %v145
    %v148 = vsel %vm146, %v147, %v145
    %v149 = vclz %v148
    %v150 = vsub.s32 %v149, 2
    %vm151 = vcmp.gt.s32.totalorder 0, %v150
    %v152 = vsel %vm151, 0, %v150
    %v153 = vsub.s32 32, %v152
    %v154 = vshll.u32 %v145, %v152
    %v155 = vshrl.u32 %v137, %v153
    %v156 = vor.u32 %v154, %v155
    %v157 = vsub.s32 4294967266, %v152
    %v158 = vadd.s32 %v157, 127
    %v159 = vshll.u32 %v158, 23
    %v160 = vor.u32 4788187, %v159
    %v161 = vand.u32 2147483647, %v160
    %v163 = vcvt.s32.f32 %v156
    %v164 = vmul.f32 %v163, %v161
    %v165 = vxor.u32 %v164, 2147483648
    %v166 = vsel %vm45, %v165, %v164
    %v167 = vsub.s32 4, %v143
    %v168 = vsel %vm45, %v167, %v143
    %v169 = vsel %vm44, %v42, %v166
    %v170 = vsel %vm44, 0, %v168
    %v171 = vmul.f32 %v169, %v169
    %v172 = vmul.f32 %v171, -0.001358992
    %v173 = vadd.f32 %v172, 0.041655596
    %v174 = vmul.f32 %v171, %v173
    %v175 = vadd.f32 %v174, -0.4999988
    %v176 = vmul.f32 %v171, %v175
    %v177 = vadd.f32 1.0, %v176
    %v178 = vmul.f32 %v169, %v169
    %v179 = vmul.f32 %v178, -0.00019511016
    %v180 = vadd.f32 %v179, 0.008332121
    %v181 = vmul.f32 %v178, %v180
    %v182 = vadd.f32 %v181, -0.16666654
    %v183 = vmul.f32 %v178, %v182
    %v184 = vadd.f32 %v183, 1.0
    %v185 = vmul.f32 %v184, %v169
    %vm186 = vweird.f32 %v42
    %v187 = vadd.s32 %v170, 3
    %v188 = vand.u32 %v187, 3
    %vm189 = vcmp.lt.s32.totalorder %v188, 2
    %vm190 = vcmp.eq.s32.totalorder %v188, 0
    %v191 = vxor.u32 %v185, 2147483648
    %v192 = vsel %vm190, %v177, %v191
    %vm193 = vcmp.eq.s32.totalorder %v188, 2
    %v194 = vxor.u32 %v177, 2147483648
    %v195 = vsel %vm193, %v194, %v185
    %v196 = vsel %vm189, %v192, %v195
    %v197 = vsel %vm186, nan, %v196
    %v198 = vld [vmem:[%s3] sm:$0xff]
    %v199 = vld [vmem:[%s3 + $0x8] sm:$0xff]
    %v200 = vld [vmem:[%s3 + $0x10] sm:$0xff]
    %v201 = vld [vmem:[%s3 + $0x18] sm:$0xff]
    %v202 = vld [vmem:[%s3 + $0x20] sm:$0xff]
    %v203 = vld [vmem:[%s3 + $0x28] sm:$0xff]
    %v204 = vld [vmem:[%s3 + $0x30] sm:$0xff]
    %v205 = vld [vmem:[%s3 + $0x38] sm:$0xff]
    %v206 = vld [vmem:[%s3 + $0x40] sm:$0xff]
    %v207 = vld [vmem:[%s3 + $0x48] sm:$0xff]
    %v208 = vld [vmem:[%s3 + $0x50] sm:$0xff]
    %v209 = vld [vmem:[%s3 + $0x58] sm:$0xff]
    %v210 = vld [vmem:[%s3 + $0x60] sm:$0xff]
    %v211 = vld [vmem:[%s3 + $0x68] sm:$0xff]
    %v212 = vld [vmem:[%s3 + $0x70] sm:$0xff]
    %v213 = vld [vmem:[%s3 + $0x78] sm:$0xff]
    %v214 = vld [vmem:[%s4] sm:$0x1]
    %v216 = vperm.slane %v214, 0
    %vm218 = vcmask 261120
    %v220 = vsel %vm218, %v197, 0
    %v223 = vsel %vm218, %v198, 0
    %v226 = vsel %vm218, %v199, 0
    %v229 = vsel %vm218, %v200, 0
    %v232 = vsel %vm218, %v201, 0
    %v235 = vsel %vm218, %v202, 0
    %v238 = vsel %vm218, %v203, 0
    %v241 = vsel %vm218, %v204, 0
    %v244 = vsel %vm218, %v205, 0
    %v247 = vsel %vm218, %v206, 0
    %v250 = vsel %vm218, %v207, 0
    %v253 = vsel %vm218, %v208, 0
    %v256 = vsel %vm218, %v209, 0
    %v259 = vsel %vm218, %v210, 0
    %v262 = vsel %vm218, %v211, 0
    %v265 = vsel %vm218, %v212, 0
    %v268 = vsel %vm218, %v213, 0
    %270 = vmatpush.xpose.msra.mxu0 %v268
    %271 = vmatpush.xpose.msra.mxu0 %v265
    %272 = vmatpush.xpose.msra.mxu0 %v262
    %273 = vmatpush.xpose.msra.mxu0 %v259
    %274 = vmatpush.xpose.msra.mxu0 %v256
    %275 = vmatpush.xpose.msra.mxu0 %v253
    %276 = vmatpush.xpose.msra.mxu0 %v250
    %277 = vmatpush.xpose.msra.mxu0 %v247
    %278 = vmatpush.xpose.msra.mxu0 %v244
    %279 = vmatpush.xpose.msra.mxu0 %v241
    %280 = vmatpush.xpose.msra.mxu0 %v238
    %281 = vmatpush.xpose.msra.mxu0 %v235
    %282 = vmatpush.xpose.msra.mxu0 %v232
    %283 = vmatpush.xpose.msra.mxu0 %v229
    %284 = vmatpush.xpose.msra.mxu0 %v226
    %285 = vmatpush.xpose.msra.mxu0 %v223
    %286 = vmatmul.f32.gmra.mxu0 %v220
    %v287 = vpop.f32.mrf.mxu0
    %v288 = vadd.f32 %v216, %v287
    %289 = vdwg.mxu0
    %v290 = vmax.f32 %v288, 0.0
    %v291 = vld [vmem:[%s5] sm:$0xff]
    %v292 = vld [vmem:[%s5 + $0x8] sm:$0xff]
    %v293 = vld [vmem:[%s5 + $0x10] sm:$0xff]
    %v294 = vld [vmem:[%s5 + $0x18] sm:$0xff]
    %v295 = vld [vmem:[%s5 + $0x20] sm:$0xff]
    %v296 = vld [vmem:[%s5 + $0x28] sm:$0xff]
    %v297 = vld [vmem:[%s5 + $0x30] sm:$0xff]
    %v298 = vld [vmem:[%s5 + $0x38] sm:$0xff]
    %v299 = vld [vmem:[%s5 + $0x40] sm:$0xff]
    %v300 = vld [vmem:[%s5 + $0x48] sm:$0xff]
    %v301 = vld [vmem:[%s5 + $0x50] sm:$0xff]
    %v302 = vld [vmem:[%s5 + $0x58] sm:$0xff]
    %v303 = vld [vmem:[%s5 + $0x60] sm:$0xff]
    %v304 = vld [vmem:[%s5 + $0x68] sm:$0xff]
    %v305 = vld [vmem:[%s5 + $0x70] sm:$0xff]
    %v306 = vld [vmem:[%s5 + $0x78] sm:$0xff]
    %v307 = vld [vmem:[%s6] sm:$0x1]
    %v309 = vperm.slane %v307, 0
    %311 = vmatpush.xpose.msra.mxu0 %v306
    %312 = vmatpush.xpose.msra.mxu0 %v305
    %313 = vmatpush.xpose.msra.mxu0 %v304
    %314 = vmatpush.xpose.msra.mxu0 %v303
    %315 = vmatpush.xpose.msra.mxu0 %v302
    %316 = vmatpush.xpose.msra.mxu0 %v301
    %317 = vmatpush.xpose.msra.mxu0 %v300
    %318 = vmatpush.xpose.msra.mxu0 %v299
    %319 = vmatpush.xpose.msra.mxu0 %v298
    %320 = vmatpush.xpose.msra.mxu0 %v297
    %321 = vmatpush.xpose.msra.mxu0 %v296
    %322 = vmatpush.xpose.msra.mxu0 %v295
    %323 = vmatpush.xpose.msra.mxu0 %v294
    %324 = vmatpush.xpose.msra.mxu0 %v293
    %325 = vmatpush.xpose.msra.mxu0 %v292
    %326 = vmatpush.xpose.msra.mxu0 %v291
    %327 = vmatmul.f32.gmra.mxu0 %v290
    %v328 = vpop.f32.mrf.mxu0
    %v329 = vadd.f32 %v309, %v328
    %330 = vdwg.mxu0
    %331 = vst [vmem:[#allocation2] sm:$0xff] %v329
    // Predicated region
    $region30: #{tpu_custom_call.1} parent=1 // pred_check
      _
    $region31: #{tpu_custom_call.1} parent=1 // pred_check_branch
      %333 = sbr.rel (0) target = $region33
    $region32: #{tpu_custom_call.1} parent=1 // pred_region
      %335 = vsyncadd [#allocation3], 0
      %s337 = sshll.u32 [#allocation2], 4
      %s338 = int_to_ptr.vmem [resolvable:$true] %s337
      %s339 = sshll.u32 %s7, 4
      %s340 = int_to_ptr.hbm [resolvable:$true] %s339
      %342 = dma.vmem_to_hbm [thread:$0]  %s338, 128, %s340, [#allocation3]
    $region33: #{tpu_custom_call.1} parent=1 // pred_fallthru
      _
    // Predicated region
    $region34: #{tpu_custom_call.1} parent=1 // pred_check
      _
    $region35: #{tpu_custom_call.1} parent=1 // pred_check_branch
      %344 = sbr.rel (0) target = $region37
    $region36: #{tpu_custom_call.1} parent=1 // pred_region
      %346 = dma.done [#allocation3], 128
    $region37: #{tpu_custom_call.1} parent=1 // pred_fallthru
      _
    %347 = vsyncpa [#allocation3], 1

</llo_original>
